<compile_context>
chip_gen: v6e
topology: v6e:2x2x1
jax: 0.10.0
libtpu: 0.0.40
codegen_flags: <defaults>
</compile_context>

<pallas_src>
import math

import jax
import jax.numpy as jnp
from jax.experimental import pallas as pl
from jax.experimental.pallas import tpu as pltpu

LANES = 128
MIN_SPLIT_ROWS = 256      # split a single tile across the 2 TCs above this many rows


def _cdiv(a: int, b: int) -> int:
    return -(-a // b)


def _round_up(n: int, m: int) -> int:
    return _cdiv(n, m) * m


def _lcm(a: int, b: int) -> int:
    return a // math.gcd(a, b) * b


def _row_align(dtype) -> int:
    """Sublane alignment in rows (8 for 32-bit, 16 for 16-bit, 32 for 8-bit)."""
    itemsize = jnp.dtype(dtype).itemsize
    return 8 * max(1, 4 // itemsize)


def _device_tuning():
    """(default max tile rows, vmem_limit_bytes) per TPU generation."""
    try:
        kind = jax.devices()[0].device_kind.lower()
    except Exception:
        return 2048, None
    if "v7" in kind:
        return 4096, 48 * 1024 * 1024      # 64 MiB physical VMEM per TC
    if "v6" in kind:
        return 4096, 64 * 1024 * 1024      # 128 MiB physical
    if "v5" in kind or "v4" in kind:
        return 2048, 64 * 1024 * 1024      # raise v5e's 16 MiB scoped default
    return 2048, None


def _to_slab(a, rows: int):
    """Flatten row-major and zero-pad into a (rows, LANES) slab in native dtype."""
    flat = jnp.ravel(a)
    pad = rows * LANES - flat.size
    if pad:
        flat = jnp.pad(flat, (0, pad))
    return flat.reshape(rows, LANES)


def _is_suffix_broadcast(w_shape, x_shape) -> bool:
    """True iff broadcast_to(w, x.shape) is periodic in flat layout with period w.size
    (i.e. w broadcasts only over leading dims of x)."""
    ws = tuple(w_shape)
    while ws and ws[0] == 1:
        ws = ws[1:]
    if len(ws) > len(x_shape):
        return False
    return tuple(x_shape[len(x_shape) - len(ws):]) == ws


# ---------------------------------------------------------------------------
# Fused single-pass reduction kernel (built per tiling geometry).
# ---------------------------------------------------------------------------
def _make_kernel(*, rep, tw, has_w):
    def to8(v):
        # (r,128) -> (8,128) per-(sublane,lane) partial sums; pure VPU adds.
        r = v.shape[0]
        return v if r == 8 else v.reshape(r // 8, 8, LANES).sum(axis=0)

    def fold(v):
        # Collapse the `rep` w-broadcast periods inside the tile to (tw,128).
        return v if rep == 1 else v.reshape(rep, tw, LANES).sum(axis=0)

    def kernel(*refs):
        if has_w:
            x_ref, y_ref, w_ref, out_ref = refs
        else:
            x_ref, y_ref, out_ref = refs

        # Output block (1, nq, 8, 128) stays VMEM-resident across the
        # "arbitrary" reduction axis; init once per output block.
        @pl.when(pl.program_id(1) == 0)
        def _init():
            out_ref[...] = jnp.zeros_like(out_ref)

        x = x_ref[...].astype(jnp.float32)
        y = y_ref[...].astype(jnp.float32)

        if has_w:
            w = w_ref[...].astype(jnp.float32)
            # Fold first, then derive BOTH the unweighted and weighted sums from
            # the small folded value: avoids multi-consumer full-tile temporaries
            # (total sums are identical; only the global sum matters).
            fx2 = fold(x * x)
            fy2 = fold(y * y)
            fxy = fold(x * y)
            out_ref[0, 0] += to8(fx2)            # sum x^2
            out_ref[0, 1] += to8(fy2)            # sum y^2
            out_ref[0, 2] += to8(w * fx2)        # sum w*x^2
            out_ref[0, 3] += to8(w * fy2)        # sum w*y^2
            out_ref[0, 4] += to8(w * fxy)        # sum w*x*y
        else:
            out_ref[0, 0] += to8(x * x)          # sum x^2
            out_ref[0, 1] += to8(y * y)          # sum y^2
            out_ref[0, 2] += to8(x * y)          # sum x*y

    return kernel


# ---------------------------------------------------------------------------
# pallas_call wrapper: geometry, BlockSpecs, grid.
# ---------------------------------------------------------------------------
def _partial_sums(x, y, w_arr, max_tile_rows):
    n_elem = x.size
    rows = _cdiv(n_elem, LANES)

    has_w = w_arr is not None
    dtypes = [x.dtype, y.dtype] + ([w_arr.dtype] if has_w else [])
    align = max(_row_align(d) for d in dtypes)

    dev_cap, vmem_limit = _device_tuning()
    cap = int(max_tile_rows) if max_tile_rows is not None else dev_cap

    # ---- w broadcast analysis (decides the tiling granule) -----------------
    periodic_candidate = False
    w_rows = 0
    if has_w:
        periodic_candidate = (_is_suffix_broadcast(w_arr.shape, x.shape)
                              and w_arr.size % LANES == 0)
        if periodic_candidate:
            w_rows = w_arr.size // LANES

    granule = align
    per = None      # in-tile w period (rows); None => index_map reuse or materialize
    if periodic_candidate:
        p = _lcm(w_rows, align)
        if p <= cap:
            granule = p
            per = p

    # ---- tile geometry: tm multiple of `granule`; even tile count so both
    # ---- TensorCores get work on v7x (harmless sequential axis elsewhere) ---
    cap_g = max(granule, (cap // granule) * granule)
    rows_min = _round_up(rows, granule)

    if rows_min <= cap_g:
        if rows_min >= max(2 * granule, MIN_SPLIT_ROWS):
            nsplit, tps = 2, 1
            tm = _round_up(_cdiv(rows_min, 2), granule)
        else:
            nsplit, tps = 1, 1
            tm = rows_min
    else:
        nsplit = 2
        n_tiles = _round_up(_cdiv(rows_min, cap_g), nsplit)
        tm = _round_up(_cdiv(rows_min, n_tiles), granule)
        tps = n_tiles // nsplit

    # Zero-padded slab: padding is finite and contributes 0 to every sum, so no
    # per-tile tail masking is needed inside the kernel.
    rows_slab = nsplit * tps * tm

    xp = _to_slab(x, rows_slab)
    yp = _to_slab(y, rows_slab)

    def xy_map(c, i, _tps=tps):
        return (c * _tps + i, 0)

    in_specs = [pl.BlockSpec((tm, LANES), xy_map),
                pl.BlockSpec((tm, LANES), xy_map)]
    operands = [xp, yp]

    tw, rep = tm, 1
    if has_w:
        if per is not None:
            # w period fits inside a tile: stream a tiny (per,128) replicated w
            # slab once (constant block index => no re-fetch) and fold in-kernel.
            tw, rep = per, tm // per
            w_flat = jnp.ravel(w_arr)
            if per != w_rows:
                w_flat = jnp.tile(w_flat, per // w_rows)
            wp = w_flat.reshape(per, LANES)
            in_specs.append(pl.BlockSpec((tw, LANES), lambda c, i: (0, 0)))
        elif periodic_candidate and w_rows % tm == 0:
            # w period spans several tiles: reuse the un-broadcast w slab via a
            # wrapping index_map (no broadcast materialization, no extra HBM).
            nwb = w_rows // tm
            wp = jnp.ravel(w_arr).reshape(w_rows, LANES)
            in_specs.append(pl.BlockSpec(
                (tm, LANES),
                lambda c, i, _tps=tps, _n=nwb: ((c * _tps + i) % _n, 0)))
        else:
            # TODO(synk): handle sub-row / non-suffix broadcast patterns in-kernel
            # instead of materializing (costs ~1 extra HBM stream).
            wp = _to_slab(jnp.broadcast_to(w_arr, x.shape), rows_slab)
            in_specs.append(pl.BlockSpec((tm, LANES), xy_map))
        operands.append(wp)

    nq = 5 if has_w else 3
    kernel = _make_kernel(rep=rep, tw=tw, has_w=has_w)

    partials = pl.pallas_call(
        kernel,
        out_shape=jax.ShapeDtypeStruct((nsplit, nq, 8, LANES), jnp.float32),
        grid_spec=pltpu.PrefetchScalarGridSpec(
            num_scalar_prefetch=0,
            grid=(nsplit, tps),
            in_specs=in_specs,
            out_specs=pl.BlockSpec((1, nq, 8, LANES), lambda c, i: (c, 0, 0, 0)),
        ),
        compiler_params=pltpu.CompilerParams(
            dimension_semantics=("parallel", "arbitrary"),
            vmem_limit_bytes=vmem_limit),
    )(*operands)

    return partials.sum(axis=(0, 2, 3))   # (nq,) global f32 sums


# ---------------------------------------------------------------------------
# Scalar epilogue + public API.
# ---------------------------------------------------------------------------
def _finalize(sums, n_elem, has_w, w_scalar, normalized, out_dtype):
    sxx, syy = sums[0], sums[1]
    if has_w:
        swxx, swyy, swxy = sums[2], sums[3], sums[4]
    else:
        swxx, swyy, swxy = sxx, syy, sums[2]
        if w_scalar is not None:        # scalar weight folds in exactly
            swxx, swyy, swxy = swxx * w_scalar, swyy * w_scalar, swxy * w_scalar

    # sum(x^2) is non-negative and non-finite iff any x was non-finite, so the
    # check is free here.  (Caveat: |x| > ~1.8e19 overflows x^2 in f32.)
    nonfinite = ~jnp.isfinite(sxx)

    nx = jnp.sqrt(sxx)
    ny = jnp.sqrt(syy)
    if normalized:
        do_norm = nx > 0.0
        sx = jnp.where(do_norm, 1.0 / nx, 1.0)
        sy = jnp.where(do_norm, 1.0 / ny, 1.0)
    else:
        sx = jnp.float32(1.0)
        sy = jnp.float32(1.0)

    inv_n = jnp.float32(1.0 / n_elem)
    # sum(w*(sx*x - sy*y)^2) via algebraic expansion.  NOTE: this cancels when
    # sx*x ~= sy*y (true loss near 0): the clamp guards the sign, but very small
    # losses carry larger relative error than a direct (x-y)^2 reduction would.
    num2 = jnp.maximum(sx * sx * swxx - 2.0 * sx * sy * swxy + sy * sy * swyy, 0.0) * inv_n
    den2 = (sy * sy * swyy) * inv_n
    loss = jnp.sqrt(num2) / jnp.sqrt(den2)
    loss = jnp.where(nonfinite, jnp.float32(jnp.nan), loss)   # NaN-poison, no host sync
    return loss.astype(out_dtype), nonfinite


def weighted_normalized_loss_stateless(x, y, w=None, normalized=True,
                                       max_tile_rows=None):
    """Fully jittable forward. Returns (loss, nonfinite_flag); non-finite x
    NaN-poisons the loss instead of raising."""
    x = jnp.asarray(x)
    y = jnp.asarray(y)
    assert x.shape == y.shape and x.size > 0

    w_arr = None
    w_scalar = None
    if w is not None:
        w_as = jnp.asarray(w)
        if w_as.size == 1:
            w_scalar = w_as.reshape(()).astype(jnp.float32)
        else:
            assert jnp.broadcast_shapes(x.shape, w_as.shape) == tuple(x.shape), \
                "w must broadcast to x.shape"
            w_arr = w_as

    sums = _partial_sums(x, y, w_arr, max_tile_rows)
    return _finalize(sums, x.size, w_arr is not None, w_scalar,
                     bool(normalized), x.dtype)


def weighted_normalized_loss(x, y, w=None, normalized=True, check_finite=True,
                             max_tile_rows=None):
    """Pallas equivalent of WeightedNormalizedLoss(w, normalized).forward(x, y).

    check_finite=True reproduces the PyTorch ValueError; it costs one host sync
    AFTER the single fused kernel (the exact non-finite count is computed only
    on the rare error path).  Set False to stay fully async / jittable.
    """
    loss, nonfinite = weighted_normalized_loss_stateless(
        x, y, w=w, normalized=normalized, max_tile_rows=max_tile_rows)
    if check_finite:
        if bool(nonfinite):                      # single device->host sync
            xa = jnp.asarray(x)
            n_bad = int(jnp.sum(~jnp.isfinite(xa)))   # rare error path only
            raise ValueError(
                f"{n_bad}/{xa.size} non-finite values (NaN, +inf, or -inf) "
                f"detected in model output.")
    # TODO(synk): logger.debug(f'loss={loss.item()}') omitted (would force a host sync).
    return loss


# ---------------------------------------------------------------------------
# Pure-JAX reference (mirrors the PyTorch forward) for sanity checks.
# ---------------------------------------------------------------------------
def _reference(x, y, w=None, normalized=True):
    xf = jnp.asarray(x, jnp.float32)
    yf = jnp.asarray(y, jnp.float32)
    wf = jnp.float32(1.0) if w is None else jnp.asarray(w, jnp.float32)
    nx = jnp.linalg.norm(xf.reshape(-1))
    ny = jnp.linalg.norm(yf.reshape(-1))
    if normalized:
        ok = nx > 0
        xf = jnp.where(ok, xf / nx, xf)
        yf = jnp.where(ok, yf / ny, yf)
    numerator = jnp.sqrt(jnp.mean((xf - yf) ** 2 * wf))
    denominator = jnp.sqrt(jnp.mean(yf ** 2 * wf))
    return numerator / denominator


if __name__ == "__main__":
    key = jax.random.PRNGKey(0)
    ks = jax.random.split(key, 10)

    # Case 1: NCHW-like x/y with a per-(C,H,W) weight broadcast over batch
    # (periodic-w path, single tile).
    x = jax.random.normal(ks[0], (2, 4, 16, 16), jnp.float32)
    y = jax.random.normal(ks[1], (2, 4, 16, 16), jnp.float32)
    w = jax.random.uniform(ks[2], (4, 16, 16), jnp.float32, minval=0.5, maxval=1.5)
    loss = weighted_normalized_loss(x, y, w=w, normalized=True)
    jax.block_until_ready(loss)
    ref = _reference(x, y, w, normalized=True)
    assert jnp.allclose(loss, ref, rtol=1e-4, atol=1e-6), (loss, ref)

    # Case 2: no weight, unnormalized (3-quantity kernel variant).
    loss2 = weighted_normalized_loss(x, y, w=None, normalized=False)
    ref2 = _reference(x, y, None, normalized=False)
    assert jnp.allclose(loss2, ref2, rtol=1e-4, atol=1e-6), (loss2, ref2)

    # Case 3: ragged size + small tile caps: multi-tile grid, dual-core split,
    # zero-padded tail, and the materialized-w fallback (w not tile-periodic here).
    x3 = jax.random.normal(ks[3], (3, 5, 16, 16), jnp.float32)
    y3 = jax.random.normal(ks[4], (3, 5, 16, 16), jnp.float32)
    w3 = jax.random.uniform(ks[5], (5, 16, 16), jnp.float32, minval=0.5, maxval=1.5)
    ref3 = _reference(x3, y3, w3, normalized=True)
    for cap in (24, 8):
        loss3 = weighted_normalized_loss(x3, y3, w=w3, normalized=True,
                                         max_tile_rows=cap)
        assert jnp.allclose(loss3, ref3, rtol=1e-4, atol=1e-6), (cap, loss3, ref3)

    # Case 4: w period larger than the tile -> wrapping index_map reuse
    # (no w broadcast materialization).
    x4 = jax.random.normal(ks[6], (2, 8, 16, 16), jnp.float32)
    y4 = jax.random.normal(ks[7], (2, 8, 16, 16), jnp.float32)
    w4 = jax.random.uniform(ks[8], (8, 16, 16), jnp.float32, minval=0.5, maxval=1.5)
    loss4 = weighted_normalized_loss(x4, y4, w=w4, normalized=True, max_tile_rows=8)
    ref4 = _reference(x4, y4, w4, normalized=True)
    assert jnp.allclose(loss4, ref4, rtol=1e-4, atol=1e-6), (loss4, ref4)

    # Case 5: bf16 inputs (16-row sublane alignment + in-kernel f32 upcast).
    xb = x.astype(jnp.bfloat16)
    yb = y.astype(jnp.bfloat16)
    loss5 = weighted_normalized_loss(xb, yb, w=w, normalized=True)
    ref5 = _reference(xb, yb, w, normalized=True)
    assert jnp.allclose(loss5.astype(jnp.float32), ref5, rtol=1e-2, atol=1e-3), (loss5, ref5)

    # Case 6: non-finite detection (flag without sync; ValueError with check_finite).
    x_bad = x.at[0, 0, 0, 0].set(jnp.nan)
    loss_bad, bad = weighted_normalized_loss_stateless(x_bad, y, w=w)
    assert bool(bad) and bool(jnp.isnan(loss_bad))
    try:
        weighted_normalized_loss(x_bad, y, w=w)
        raised = False
    except ValueError:
        raised = True
    assert raised

    jax.block_until_ready(loss)
    print("KERNEL_OK")
</pallas_src>

<mosaic_0001>
module attributes {stable_mosaic.version = 11 : i64} {
  func.func @kernel(%arg0: i32, %arg1: i32, %arg2: memref<16x128xf32, #tpu.memory_space<vmem>>, %arg3: memref<16x128xf32, #tpu.memory_space<vmem>>, %arg4: memref<8x128xf32, #tpu.memory_space<vmem>>, %arg5: memref<1x5x8x128xf32, #tpu.memory_space<vmem>>) attributes {dimension_semantics = [#tpu.dimension_semantics<parallel>, #tpu.dimension_semantics<arbitrary>], iteration_bounds = array<i64: 1, 1>, scalar_prefetch = 0 : i64, scratch_operands = 0 : i64, tpu.core_type = #tpu.core_type<tc>, window_params = [{transform_indices = @transform_0, window_bounds = array<i64: 16, 128>}, {transform_indices = @transform_1, window_bounds = array<i64: 16, 128>}, {pipeline_mode = #tpu.pipeline_mode<synchronous>, transform_indices = @transform_2, window_bounds = array<i64: 8, 128>}, {transform_indices = @transform_3, window_bounds = array<i64: 1, 5, 8, 128>}]} {
    %c0_i32 = arith.constant 0 : i32
    %0 = arith.cmpi eq, %arg1, %c0_i32 : i32
    %1 = arith.extui %0 : i1 to i32
    %c0_i32_0 = arith.constant 0 : i32
    %2 = arith.cmpi ne, %1, %c0_i32_0 : i32
    scf.if %2 {
      %cst_44 = arith.constant 0.000000e+00 : f32
      %48 = vector.broadcast %cst_44 : f32 to vector<1x5x8x128xf32>
      %c0_45 = arith.constant 0 : index
      %c0_46 = arith.constant 0 : index
      %c0_47 = arith.constant 0 : index
      %c0_48 = arith.constant 0 : index
      %49 = vector.load %arg5[%c0_45, %c0_46, %c0_47, %c0_48] : memref<1x5x8x128xf32, #tpu.memory_space<vmem>>, vector<1x5x8x128xf32>
      tpu.vector_store %arg5[%c0_45, %c0_46, %c0_47, %c0_48], %48 {strides = array<i32>} : memref<1x5x8x128xf32, #tpu.memory_space<vmem>>, vector<1x5x8x128xf32>,
    } else {
    }
    %c0 = arith.constant 0 : index
    %c0_1 = arith.constant 0 : index
    %3 = vector.load %arg2[%c0, %c0_1] : memref<16x128xf32, #tpu.memory_space<vmem>>, vector<16x128xf32>
    %c0_2 = arith.constant 0 : index
    %c0_3 = arith.constant 0 : index
    %4 = vector.load %arg3[%c0_2, %c0_3] : memref<16x128xf32, #tpu.memory_space<vmem>>, vector<16x128xf32>
    %c0_4 = arith.constant 0 : index
    %c0_5 = arith.constant 0 : index
    %5 = vector.load %arg4[%c0_4, %c0_5] : memref<8x128xf32, #tpu.memory_space<vmem>>, vector<8x128xf32>
    %6 = arith.mulf %3, %3 : vector<16x128xf32>
    %7 = vector.shape_cast %6 : vector<16x128xf32> to vector<2x8x128xf32>
    %cst = arith.constant dense<0.000000e+00> : vector<8x128xf32>
    %8 = vector.multi_reduction <add>, %7, %cst [0] : vector<2x8x128xf32> to vector<8x128xf32>
    %9 = arith.mulf %4, %4 : vector<16x128xf32>
    %10 = vector.shape_cast %9 : vector<16x128xf32> to vector<2x8x128xf32>
    %cst_6 = arith.constant dense<0.000000e+00> : vector<8x128xf32>
    %11 = vector.multi_reduction <add>, %10, %cst_6 [0] : vector<2x8x128xf32> to vector<8x128xf32>
    %12 = arith.mulf %3, %4 : vector<16x128xf32>
    %13 = vector.shape_cast %12 : vector<16x128xf32> to vector<2x8x128xf32>
    %cst_7 = arith.constant dense<0.000000e+00> : vector<8x128xf32>
    %14 = vector.multi_reduction <add>, %13, %cst_7 [0] : vector<2x8x128xf32> to vector<8x128xf32>
    %c0_8 = arith.constant 0 : index
    %c0_9 = arith.constant 0 : index
    %c0_10 = arith.constant 0 : index
    %c0_11 = arith.constant 0 : index
    %15 = vector.load %arg5[%c0_8, %c0_9, %c0_10, %c0_11] : memref<1x5x8x128xf32, #tpu.memory_space<vmem>>, vector<1x1x8x128xf32>
    %16 = vector.shape_cast %15 : vector<1x1x8x128xf32> to vector<8x128xf32>
    %17 = arith.addf %16, %8 : vector<8x128xf32>
    %c0_12 = arith.constant 0 : index
    %c0_13 = arith.constant 0 : index
    %c0_14 = arith.constant 0 : index
    %c0_15 = arith.constant 0 : index
    %18 = vector.load %arg5[%c0_12, %c0_13, %c0_14, %c0_15] : memref<1x5x8x128xf32, #tpu.memory_space<vmem>>, vector<1x1x8x128xf32>
    %19 = vector.shape_cast %18 : vector<1x1x8x128xf32> to vector<8x128xf32>
    %20 = vector.shape_cast %17 : vector<8x128xf32> to vector<1x1x8x128xf32>
    tpu.vector_store %arg5[%c0_12, %c0_13, %c0_14, %c0_15], %20 {strides = array<i32>} : memref<1x5x8x128xf32, #tpu.memory_space<vmem>>, vector<1x1x8x128xf32>,
    %c0_16 = arith.constant 0 : index
    %c1 = arith.constant 1 : index
    %c0_17 = arith.constant 0 : index
    %c0_18 = arith.constant 0 : index
    %21 = vector.load %arg5[%c0_16, %c1, %c0_17, %c0_18] : memref<1x5x8x128xf32, #tpu.memory_space<vmem>>, vector<1x1x8x128xf32>
    %22 = vector.shape_cast %21 : vector<1x1x8x128xf32> to vector<8x128xf32>
    %23 = arith.addf %22, %11 : vector<8x128xf32>
    %c0_19 = arith.constant 0 : index
    %c1_20 = arith.constant 1 : index
    %c0_21 = arith.constant 0 : index
    %c0_22 = arith.constant 0 : index
    %24 = vector.load %arg5[%c0_19, %c1_20, %c0_21, %c0_22] : memref<1x5x8x128xf32, #tpu.memory_space<vmem>>, vector<1x1x8x128xf32>
    %25 = vector.shape_cast %24 : vector<1x1x8x128xf32> to vector<8x128xf32>
    %26 = vector.shape_cast %23 : vector<8x128xf32> to vector<1x1x8x128xf32>
    tpu.vector_store %arg5[%c0_19, %c1_20, %c0_21, %c0_22], %26 {strides = array<i32>} : memref<1x5x8x128xf32, #tpu.memory_space<vmem>>, vector<1x1x8x128xf32>,
    %c0_23 = arith.constant 0 : index
    %c2 = arith.constant 2 : index
    %c0_24 = arith.constant 0 : index
    %c0_25 = arith.constant 0 : index
    %27 = vector.load %arg5[%c0_23, %c2, %c0_24, %c0_25] : memref<1x5x8x128xf32, #tpu.memory_space<vmem>>, vector<1x1x8x128xf32>
    %28 = vector.shape_cast %27 : vector<1x1x8x128xf32> to vector<8x128xf32>
    %29 = arith.mulf %5, %8 : vector<8x128xf32>
    %30 = arith.addf %28, %29 : vector<8x128xf32>
    %c0_26 = arith.constant 0 : index
    %c2_27 = arith.constant 2 : index
    %c0_28 = arith.constant 0 : index
    %c0_29 = arith.constant 0 : index
    %31 = vector.load %arg5[%c0_26, %c2_27, %c0_28, %c0_29] : memref<1x5x8x128xf32, #tpu.memory_space<vmem>>, vector<1x1x8x128xf32>
    %32 = vector.shape_cast %31 : vector<1x1x8x128xf32> to vector<8x128xf32>
    %33 = vector.shape_cast %30 : vector<8x128xf32> to vector<1x1x8x128xf32>
    tpu.vector_store %arg5[%c0_26, %c2_27, %c0_28, %c0_29], %33 {strides = array<i32>} : memref<1x5x8x128xf32, #tpu.memory_space<vmem>>, vector<1x1x8x128xf32>,
    %c0_30 = arith.constant 0 : index
    %c3 = arith.constant 3 : index
    %c0_31 = arith.constant 0 : index
    %c0_32 = arith.constant 0 : index
    %34 = vector.load %arg5[%c0_30, %c3, %c0_31, %c0_32] : memref<1x5x8x128xf32, #tpu.memory_space<vmem>>, vector<1x1x8x128xf32>
    %35 = vector.shape_cast %34 : vector<1x1x8x128xf32> to vector<8x128xf32>
    %36 = arith.mulf %5, %11 : vector<8x128xf32>
    %37 = arith.addf %35, %36 : vector<8x128xf32>
    %c0_33 = arith.constant 0 : index
    %c3_34 = arith.constant 3 : index
    %c0_35 = arith.constant 0 : index
    %c0_36 = arith.constant 0 : index
    %38 = vector.load %arg5[%c0_33, %c3_34, %c0_35, %c0_36] : memref<1x5x8x128xf32, #tpu.memory_space<vmem>>, vector<1x1x8x128xf32>
    %39 = vector.shape_cast %38 : vector<1x1x8x128xf32> to vector<8x128xf32>
    %40 = vector.shape_cast %37 : vector<8x128xf32> to vector<1x1x8x128xf32>
    tpu.vector_store %arg5[%c0_33, %c3_34, %c0_35, %c0_36], %40 {strides = array<i32>} : memref<1x5x8x128xf32, #tpu.memory_space<vmem>>, vector<1x1x8x128xf32>,
    %c0_37 = arith.constant 0 : index
    %c4 = arith.constant 4 : index
    %c0_38 = arith.constant 0 : index
    %c0_39 = arith.constant 0 : index
    %41 = vector.load %arg5[%c0_37, %c4, %c0_38, %c0_39] : memref<1x5x8x128xf32, #tpu.memory_space<vmem>>, vector<1x1x8x128xf32>
    %42 = vector.shape_cast %41 : vector<1x1x8x128xf32> to vector<8x128xf32>
    %43 = arith.mulf %5, %14 : vector<8x128xf32>
    %44 = arith.addf %42, %43 : vector<8x128xf32>
    %c0_40 = arith.constant 0 : index
    %c4_41 = arith.constant 4 : index
    %c0_42 = arith.constant 0 : index
    %c0_43 = arith.constant 0 : index
    %45 = vector.load %arg5[%c0_40, %c4_41, %c0_42, %c0_43] : memref<1x5x8x128xf32, #tpu.memory_space<vmem>>, vector<1x1x8x128xf32>
    %46 = vector.shape_cast %45 : vector<1x1x8x128xf32> to vector<8x128xf32>
    %47 = vector.shape_cast %44 : vector<8x128xf32> to vector<1x1x8x128xf32>
    tpu.vector_store %arg5[%c0_40, %c4_41, %c0_42, %c0_43], %47 {strides = array<i32>} : memref<1x5x8x128xf32, #tpu.memory_space<vmem>>, vector<1x1x8x128xf32>,
    return
  }
  func.func @transform_0(%arg0: i32, %arg1: i32) -> (i32, i32) {
    %c1_i32 = arith.constant 1 : i32
    %0 = arith.muli %arg0, %c1_i32 : i32
    %1 = arith.addi %0, %arg1 : i32
    %c0_i32 = arith.constant 0 : i32
    %c0_i32_0 = arith.constant 0 : i32
    return %1, %c0_i32 : i32, i32
  }
  func.func @transform_1(%arg0: i32, %arg1: i32) -> (i32, i32) {
    %c1_i32 = arith.constant 1 : i32
    %0 = arith.muli %arg0, %c1_i32 : i32
    %1 = arith.addi %0, %arg1 : i32
    %c0_i32 = arith.constant 0 : i32
    %c0_i32_0 = arith.constant 0 : i32
    return %1, %c0_i32 : i32, i32
  }
  func.func @transform_2(%arg0: i32, %arg1: i32) -> (i32, i32) {
    %c0_i32 = arith.constant 0 : i32
    %c0_i32_0 = arith.constant 0 : i32
    %c0_i32_1 = arith.constant 0 : i32
    return %c0_i32, %c0_i32_0 : i32, i32
  }
  func.func @transform_3(%arg0: i32, %arg1: i32) -> (i32, i32, i32, i32) {
    %c0_i32 = arith.constant 0 : i32
    %c0_i32_0 = arith.constant 0 : i32
    %c0_i32_1 = arith.constant 0 : i32
    %c0_i32_2 = arith.constant 0 : i32
    return %arg0, %c0_i32, %c0_i32_0, %c0_i32_1 : i32, i32, i32, i32
  }
}

</mosaic_0001>

<llo_original>
// kernel: tpu_custom_call.1
$region0: #{tpu_custom_call.1}
  #allocation0 [shape = 'u32[]', space=smem, size = 0x4, offset = 0x4, fixed_abs, tag = 'smem constant byte address 0x4 - core index']
  #allocation1 [shape = 'u32[144,128]{1,0:T(1,128)}', space=vmem, size = 0x12000, scoped, tag = 'internal scratch']
  %s0 = inlined_call_operand.hbm [shape: f32[16,128], index: 0, kind: input, shape index: {}]
  %s1 = inlined_call_operand.hbm [shape: f32[16,128], index: 1, kind: input, shape index: {}]
  %s2 = inlined_call_operand.hbm [shape: f32[8,128], index: 2, kind: input, shape index: {}]
  %s3 = inlined_call_operand.hbm [shape: f32[1,5,8,128], index: 3, kind: output, shape index: {}]
  %s4 = sld [smem:[#allocation0]]
  $region38: #{tpu_custom_call.1} parent=0
    _
  %s6 = ssub.s32 1, %s4
  %s7 = scalar_select 0, %s6, %s4
  $region1: #{tpu_custom_call.1} parent=0
    #allocation2 [shape = 'u8[8192]{0}', space=vmem, size = 0x2000, scoped, tag = 'input window, operand 0, single buffered']
    #allocation3 [shape = 's32[1]{0}', space=sflag, size = 0x4, scoped, tag = 'scoped memory for tpu_custom_call.1']
    #allocation4 [shape = 's32[1]{0}', space=sflag, size = 0x4, scoped, tag = 'scoped memory for tpu_custom_call.1']
    #allocation5 [shape = 'u8[8192]{0}', space=vmem, size = 0x2000, scoped, tag = 'input window, operand 1, single buffered']
    #allocation6 [shape = 's32[1]{0}', space=sflag, size = 0x4, scoped, tag = 'scoped memory for tpu_custom_call.1']
    #allocation7 [shape = 'u8[4096]{0}', space=vmem, size = 0x1000, scoped, tag = 'input window, operand 2, single buffered']
    #allocation8 [shape = 'u8[20480]{0}', space=vmem, size = 0x5000, scoped, tag = 'output window, operand 0, single buffered']
    %8 = vsyncpa [#allocation3], 0
    %9 = vsyncpa [#allocation6], 0
    %10 = vsyncpa [#allocation4], 0
    // Predicated region
    $region2: #{tpu_custom_call.1} parent=1 // pred_check
      _
    $region3: #{tpu_custom_call.1} parent=1 // pred_check_branch
      %12 = sbr.rel (0) target = $region5
    $region4: #{tpu_custom_call.1} parent=1 // pred_region
      %s13 = sadd.s32 0, 0
      %s14 = smul.u32 2, %s13
      %s16 = ssub.s32 256, 256
      %17 = vsyncadd [#allocation3], %s16
      %s18 = smul.addr %s14, 128
      %s19 = scalar_lea.hbm %s0, %s18
      %s20 = sshll.u32 [#allocation2], 4
      %s21 = int_to_ptr.vmem [resolvable:$true] %s20
      %26 = dma.hbm_to_vmem [thread:$0]  %s19, 256, %s21, [#allocation3], 128, 128, 8
    $region5: #{tpu_custom_call.1} parent=1 // pred_fallthru
      _
    // Predicated region
    $region6: #{tpu_custom_call.1} parent=1 // pred_check
      _
    $region7: #{tpu_custom_call.1} parent=1 // pred_check_branch
      %28 = sbr.rel (0) target = $region9
    $region8: #{tpu_custom_call.1} parent=1 // pred_region
      %s29 = sadd.s32 0, 0
      %s30 = smul.u32 2, %s29
      %s32 = ssub.s32 256, 256
      %33 = vsyncadd [#allocation6], %s32
      %s34 = smul.addr %s30, 128
      %s35 = scalar_lea.hbm %s1, %s34
      %s36 = sshll.u32 [#allocation5], 4
      %s37 = int_to_ptr.vmem [resolvable:$true] %s36
      %42 = dma.hbm_to_vmem [thread:$0]  %s35, 256, %s37, [#allocation6], 128, 128, 8
    $region9: #{tpu_custom_call.1} parent=1 // pred_fallthru
      _
    // Predicated region
    $region10: #{tpu_custom_call.1} parent=1 // pred_check
      _
    $region11: #{tpu_custom_call.1} parent=1 // pred_check_branch
      %44 = sbr.rel (0) target = $region13
    $region12: #{tpu_custom_call.1} parent=1 // pred_region
      %s46 = ssub.s32 128, 128
      %47 = vsyncadd [#allocation6], %s46
      %s49 = sshll.u32 [#allocation7], 4
      %s50 = int_to_ptr.vmem [resolvable:$true] %s49
      %52 = dma.hbm_to_vmem [thread:$0]  %s2, 128, %s50, [#allocation6]
    $region13: #{tpu_custom_call.1} parent=1 // pred_fallthru
      _
    // Predicated region
    $region14: #{tpu_custom_call.1} parent=1 // pred_check
      _
    $region15: #{tpu_custom_call.1} parent=1 // pred_check_branch
      %54 = sbr.rel (0) target = $region17
    $region16: #{tpu_custom_call.1} parent=1 // pred_region
      %55 = dma.done [#allocation3], 256
    $region17: #{tpu_custom_call.1} parent=1 // pred_fallthru
      _
    // Predicated region
    $region18: #{tpu_custom_call.1} parent=1 // pred_check
      _
    $region19: #{tpu_custom_call.1} parent=1 // pred_check_branch
      %57 = sbr.rel (0) target = $region21
    $region20: #{tpu_custom_call.1} parent=1 // pred_region
      %58 = dma.done [#allocation6], 256
    $region21: #{tpu_custom_call.1} parent=1 // pred_fallthru
      _
    // Predicated region
    $region22: #{tpu_custom_call.1} parent=1 // pred_check
      _
    $region23: #{tpu_custom_call.1} parent=1 // pred_check_branch
      %60 = sbr.rel (0) target = $region25
    $region24: #{tpu_custom_call.1} parent=1 // pred_region
      %61 = dma.done [#allocation6], 128
    $region25: #{tpu_custom_call.1} parent=1 // pred_fallthru
      _
    %s62 = sadd.s32 0, 0
    %s63 = smul.u32 2, %s62
    %s64 = sadd.s32 0, 0
    %s65 = smul.u32 2, %s64
    %p66 = scmp.eq.s32.totalorder 0, 0
    // Predicated region
    $region26: #{tpu_custom_call.1} parent=1 // pred_check
      %p67 = pneg %p66
    $region27: #{tpu_custom_call.1} parent=1 // pred_check_branch
      %69 = sbr.rel (%p67) target = $region29
    $region28: #{tpu_custom_call.1} parent=1 // pred_region
      %70 = vst [vmem:[#allocation8] sm:$0xff] 0.0
      %71 = vst [vmem:[#allocation8 + $0x8] sm:$0xff] 0.0
      %72 = vst [vmem:[#allocation8 + $0x10] sm:$0xff] 0.0
      %73 = vst [vmem:[#allocation8 + $0x18] sm:$0xff] 0.0
      %74 = vst [vmem:[#allocation8 + $0x20] sm:$0xff] 0.0
    $region29: #{tpu_custom_call.1} parent=1 // pred_fallthru
      _
    %v75 = vld [vmem:[#allocation2] sm:$0xff]
    %v76 = vld [vmem:[#allocation2 + $0x8] sm:$0xff]
    %v77 = vld [vmem:[#allocation5] sm:$0xff]
    %v78 = vld [vmem:[#allocation5 + $0x8] sm:$0xff]
    %v79 = vld [vmem:[#allocation7] sm:$0xff]
    %v80 = vmul.f32 %v75, %v75
    %v81 = vmul.f32 %v76, %v76
    %v82 = vadd.f32 %v80, %v81
    %v83 = vmul.f32 %v77, %v77
    %v84 = vmul.f32 %v78, %v78
    %v85 = vadd.f32 %v83, %v84
    %v86 = vmul.f32 %v75, %v77
    %v87 = vmul.f32 %v76, %v78
    %v88 = vadd.f32 %v86, %v87
    %v89 = vld [vmem:[#allocation8] sm:$0xff]
    %v90 = vadd.f32 %v89, %v82
    %91 = vst [vmem:[#allocation8] sm:$0xff] %v90
    %s92 = scalar_lea.vmem [#allocation8], 8
    %v93 = vld [vmem:[%s92] sm:$0xff]
    %v94 = vadd.f32 %v93, %v85
    %95 = vst [vmem:[%s92] sm:$0xff] %v94
    %s96 = scalar_lea.vmem [#allocation8], 16
    %v97 = vld [vmem:[%s96] sm:$0xff]
    %v98 = vmul.f32 %v79, %v82
    %v99 = vadd.f32 %v97, %v98
    %100 = vst [vmem:[%s96] sm:$0xff] %v99
    %s101 = scalar_lea.vmem [#allocation8], 24
    %v102 = vld [vmem:[%s101] sm:$0xff]
    %v103 = vmul.f32 %v79, %v85
    %v104 = vadd.f32 %v102, %v103
    %105 = vst [vmem:[%s101] sm:$0xff] %v104
    %s106 = scalar_lea.vmem [#allocation8], 32
    %v107 = vld [vmem:[%s106] sm:$0xff]
    %v108 = vmul.f32 %v79, %v88
    %v109 = vadd.f32 %v107, %v108
    %110 = vst [vmem:[%s106] sm:$0xff] %v109
    // Predicated region
    $region30: #{tpu_custom_call.1} parent=1 // pred_check
      _
    $region31: #{tpu_custom_call.1} parent=1 // pred_check_branch
      %112 = sbr.rel (0) target = $region33
    $region32: #{tpu_custom_call.1} parent=1 // pred_region
      %s114 = ssub.s32 640, 640
      %115 = vsyncadd [#allocation4], %s114
      %s116 = sshll.u32 [#allocation8], 4
      %s117 = int_to_ptr.vmem [resolvable:$true] %s116
      %122 = dma.vmem_to_hbm [thread:$0]  %s117, 640, %s3, [#allocation4], 128, 128, 8
    $region33: #{tpu_custom_call.1} parent=1 // pred_fallthru
      _
    // Predicated region
    $region34: #{tpu_custom_call.1} parent=1 // pred_check
      _
    $region35: #{tpu_custom_call.1} parent=1 // pred_check_branch
      %124 = sbr.rel (0) target = $region37
    $region36: #{tpu_custom_call.1} parent=1 // pred_region
      %125 = dma.done [#allocation4], 640
    $region37: #{tpu_custom_call.1} parent=1 // pred_fallthru
      _
    %126 = vsyncpa [#allocation3], 1
    %127 = vsyncpa [#allocation6], 1
    %128 = vsyncpa [#allocation4], 1

</llo_original>
